<compile_context>
chip_gen: v7x
topology: tpu7x:2x2x1
jax: 0.10.0
libtpu: 0.0.40
codegen_flags: <defaults>
</compile_context>

<pallas_src>
import jax
import jax.numpy as jnp
from jax.experimental import pallas as pl
from jax.experimental.pallas import tpu as pltpu


def _relu_kernel(x_ref, o_ref):
    o_ref[...] = jnp.maximum(x_ref[...], jnp.zeros((), x_ref.dtype))


_LANE = 128
_LANE_CANDIDATES = (2048, 1024, 512, 256, 128)


def rectified_linear(x, *, target_block_bytes=8 << 20, min_pallas_bytes=1 << 20,
                     donate_input=False):
    """ReLU via Pallas. x: (B, T, D) (or any >=1-D array)."""
    orig_shape = x.shape
    dtype = x.dtype
    n = x.size
    if n == 0:
        return x
    itemsize = jnp.dtype(dtype).itemsize

    # Tiny inputs: kernel launch + DMA setup dominates; let XLA fuse the ReLU.
    if n * itemsize < min_pallas_bytes:
        return jnp.maximum(x, jnp.zeros((), dtype))

    # --- pick a lane-dense 2-D view: last dim a multiple of 128 when possible ---
    D = orig_shape[-1] if x.ndim >= 1 else n
    if D % _LANE == 0:
        W = D                                            # already lane-dense, no relayout
    else:
        W = next((c for c in _LANE_CANDIDATES if n % c == 0), None)
        if W is None:
            W = D                                        # fallback: masked stores, still correct
    R = n // W
    x2 = x.reshape(R, W)

    # --- VMEM-budgeted block rows: (in + out) * double-buffer = 4 live buffers ---
    sublane = 8 * max(1, 4 // itemsize)                  # 8 f32 / 16 bf16 / 32 int8
    per_buf = max(target_block_bytes // 4, sublane * W * itemsize)
    tr = per_buf // (W * itemsize)
    tr = max(sublane, (tr // sublane) * sublane)         # keep (8,128)-friendly
    if tr >= R:
        tr = R                                           # single full-extent block on rows
    grid_r = pl.cdiv(R, tr)                              # partial last block masked by Pallas

    out = pl.pallas_call(
        _relu_kernel,
        out_shape=jax.ShapeDtypeStruct((R, W), dtype),
        grid_spec=pltpu.PrefetchScalarGridSpec(
            num_scalar_prefetch=0,
            grid=(grid_r,),
            in_specs=[pl.BlockSpec((tr, W), lambda i: (i, 0))],
            out_specs=pl.BlockSpec((tr, W), lambda i: (i, 0)),
        ),
        compiler_params=pltpu.CompilerParams(
            dimension_semantics=("parallel",),           # v7x: shard rows across 2 TCs
            vmem_limit_bytes=32 << 20,                   # safe on v5e/v6e/v7x, ample headroom
        ),
        cost_estimate=pl.CostEstimate(
            flops=n, transcendentals=0, bytes_accessed=2 * n * itemsize),
        input_output_aliases=({0: 0} if donate_input else {}),
    )(x2)

    return out.reshape(orig_shape)


if __name__ == "__main__":
    key = jax.random.PRNGKey(0)

    def ref(v):
        return jnp.maximum(v, jnp.zeros((), v.dtype))

    # (1) module-natural small shape (batch, seq, hidden) = (2, 8, 32); force Pallas path.
    x1 = jax.random.normal(key, (2, 8, 32), dtype=jnp.float32)
    y1 = rectified_linear(x1, min_pallas_bytes=0)
    jax.block_until_ready(y1)
    assert y1.shape == x1.shape and y1.dtype == x1.dtype
    assert bool(jnp.all(y1 == ref(x1)))

    # (2) non-divisible rows -> exercises the cdiv grid / masked partial last block.
    x2 = jax.random.normal(jax.random.fold_in(key, 1), (2, 100, 32), dtype=jnp.float32)
    y2 = rectified_linear(x2, min_pallas_bytes=0,
                          target_block_bytes=4 * 8 * 256 * 4)  # tiny budget -> grid > 1
    jax.block_until_ready(y2)
    assert bool(jnp.all(y2 == ref(x2)))

    # (3) element count not a multiple of 128 -> fallback (R, D) layout, partial block.
    x3 = jax.random.normal(jax.random.fold_in(key, 2), (2, 7, 33), dtype=jnp.float32)
    y3 = rectified_linear(x3, min_pallas_bytes=0, target_block_bytes=4 * 8 * 33 * 4)
    jax.block_until_ready(y3)
    assert bool(jnp.all(y3 == ref(x3)))

    # (4) bf16 path (sublane packing = 16).
    x4 = jax.random.normal(jax.random.fold_in(key, 3), (2, 64, 128), dtype=jnp.bfloat16)
    y4 = rectified_linear(x4, min_pallas_bytes=0)
    jax.block_until_ready(y4)
    assert bool(jnp.all(y4 == ref(x4)))

    # (5) small-input bypass with default thresholds.
    y5 = rectified_linear(x1)
    jax.block_until_ready(y5)
    assert bool(jnp.all(y5 == ref(x1)))

    # TODO(synk): nn.Dropout(0.1) exists on the module but is never called in forward(),
    # so it is intentionally not implemented.
    print("KERNEL_OK")
</pallas_src>

<mosaic_0001>
module attributes {stable_mosaic.version = 11 : i64} {
  func.func @_relu_kernel(%arg0: i32, %arg1: memref<1x512xf32, #tpu.memory_space<vmem>>, %arg2: memref<1x512xf32, #tpu.memory_space<vmem>>) attributes {dimension_semantics = [#tpu.dimension_semantics<parallel>], iteration_bounds = array<i64: 1>, scalar_prefetch = 0 : i64, scratch_operands = 0 : i64, tpu.core_type = #tpu.core_type<tc>, window_params = [{transform_indices = @transform_0, window_bounds = array<i64: 1, 512>}, {transform_indices = @transform_1, window_bounds = array<i64: 1, 512>}]} {
    %c0 = arith.constant 0 : index
    %c0_0 = arith.constant 0 : index
    %0 = vector.load %arg1[%c0, %c0_0] : memref<1x512xf32, #tpu.memory_space<vmem>>, vector<1x512xf32>
    %cst = arith.constant 0.000000e+00 : f32
    %1 = vector.broadcast %cst : f32 to vector<1x512xf32>
    %2 = arith.maximumf %0, %1 : vector<1x512xf32>
    %c0_1 = arith.constant 0 : index
    %c0_2 = arith.constant 0 : index
    %3 = vector.load %arg2[%c0_1, %c0_2] : memref<1x512xf32, #tpu.memory_space<vmem>>, vector<1x512xf32>
    tpu.vector_store %arg2[%c0_1, %c0_2], %2 {strides = array<i32>} : memref<1x512xf32, #tpu.memory_space<vmem>>, vector<1x512xf32>,
    return
  }
  func.func @transform_0(%arg0: i32) -> (i32, i32) {
    %c0_i32 = arith.constant 0 : i32
    %c0_i32_0 = arith.constant 0 : i32
    return %arg0, %c0_i32 : i32, i32
  }
  func.func @transform_1(%arg0: i32) -> (i32, i32) {
    %c0_i32 = arith.constant 0 : i32
    %c0_i32_0 = arith.constant 0 : i32
    return %arg0, %c0_i32 : i32, i32
  }
}

</mosaic_0001>

<llo_original>
// kernel: tpu_custom_call.1
$region0: #{tpu_custom_call.1}
  #allocation0 [shape = 'u32[]', space=smem, size = 0x4, offset = 0x4, fixed_abs, tag = 'smem constant byte address 0x4 - core index']
  #allocation1 [shape = 'u32[144,128]{1,0:T(1,128)}', space=vmem, size = 0x12000, scoped, tag = 'internal scratch']
  %s0 = inlined_call_operand.hbm [shape: f32[1,512], index: 0, kind: input, shape index: {}]
  %s1 = inlined_call_operand.hbm [shape: f32[1,512], index: 1, kind: output, shape index: {}]
  %s2 = sld [smem:[#allocation0]]
  $region18: #{tpu_custom_call.1} parent=0
    _
  %s4 = ssub.s32 1, %s2
  %s5 = scalar_select 0, %s4, %s2
  $region1: #{tpu_custom_call.1} parent=0
    #allocation2 [shape = 'u8[2048]{0}', space=vmem, size = 0x800, scoped, tag = 'input window, operand 0, single buffered']
    #allocation3 [shape = 's32[1]{0}', space=sflag, size = 0x4, scoped, tag = 'scoped memory for tpu_custom_call.1']
    #allocation4 [shape = 's32[1]{0}', space=sflag, size = 0x4, scoped, tag = 'scoped memory for tpu_custom_call.1']
    #allocation5 [shape = 'u8[2048]{0}', space=vmem, size = 0x800, scoped, tag = 'output window, operand 0, single buffered']
    %6 = vsyncpa [#allocation3], 0
    %7 = vsyncpa [#allocation4], 0
    // Predicated region
    $region2: #{tpu_custom_call.1} parent=1 // pred_check
      _
    $region3: #{tpu_custom_call.1} parent=1 // pred_check_branch
      %9 = sbr.rel (0) target = $region5
    $region4: #{tpu_custom_call.1} parent=1 // pred_region
      %s11 = ssub.s32 64, 64
      %12 = vsyncadd [#allocation3], %s11
      %s14 = sshll.u32 [#allocation2], 4
      %s15 = int_to_ptr.vmem [resolvable:$true] %s14
      %17 = dma.hbm_to_vmem [thread:$0]  %s0, 64, %s15, [#allocation3]
    $region5: #{tpu_custom_call.1} parent=1 // pred_fallthru
      _
    // Predicated region
    $region6: #{tpu_custom_call.1} parent=1 // pred_check
      _
    $region7: #{tpu_custom_call.1} parent=1 // pred_check_branch
      %19 = sbr.rel (0) target = $region9
    $region8: #{tpu_custom_call.1} parent=1 // pred_region
      %20 = dma.done [#allocation3], 64
    $region9: #{tpu_custom_call.1} parent=1 // pred_fallthru
      _
    %v21 = vld [vmem:[#allocation2] sm:$0xf]
    %v22 = vmax.f32 %v21, 0.0
    %v23 = vlaneseq
    %vm24 = vcmp.ge.s32.totalorder %v23, 0
    %vm25 = vcmp.lt.s32.totalorder %v23, 512
    %vm26 = vmand %vm24, %vm25
    %27 = vst.msk [vmem:[#allocation5] sm:$0xf] %vm26, %v22
    // Predicated region
    $region10: #{tpu_custom_call.1} parent=1 // pred_check
      _
    $region11: #{tpu_custom_call.1} parent=1 // pred_check_branch
      %29 = sbr.rel (0) target = $region13
    $region12: #{tpu_custom_call.1} parent=1 // pred_region
      %s31 = ssub.s32 64, 64
      %32 = vsyncadd [#allocation4], %s31
      %s34 = sshll.u32 [#allocation5], 4
      %s35 = int_to_ptr.vmem [resolvable:$true] %s34
      %37 = dma.vmem_to_hbm [thread:$0]  %s35, 64, %s1, [#allocation4]
    $region13: #{tpu_custom_call.1} parent=1 // pred_fallthru
      _
    // Predicated region
    $region14: #{tpu_custom_call.1} parent=1 // pred_check
      _
    $region15: #{tpu_custom_call.1} parent=1 // pred_check_branch
      %39 = sbr.rel (0) target = $region17
    $region16: #{tpu_custom_call.1} parent=1 // pred_region
      %40 = dma.done [#allocation4], 64
    $region17: #{tpu_custom_call.1} parent=1 // pred_fallthru
      _
    %41 = vsyncpa [#allocation3], 1
    %42 = vsyncpa [#allocation4], 1

</llo_original>
